<compile_context>
chip_gen: v7x
topology: tpu7x:2x2x1
jax: 0.10.0
libtpu: 0.0.40
codegen_flags: <defaults>
</compile_context>

<pallas_src>
import functools

import jax
import jax.numpy as jnp
from jax.experimental import pallas as pl
from jax.experimental.pallas import tpu as pltpu


# --------------------------------------------------------------------------
# small host-side helpers
# --------------------------------------------------------------------------
def _cdiv(a, b):
    return (a + b - 1) // b


def _round_up(x, m):
    return _cdiv(x, m) * m


def _vmem_capacity_bytes():
    try:
        info = pltpu.get_tpu_info()
        cap = getattr(info, "vmem_capacity_bytes", None)
        if cap:
            return int(cap)
    except Exception:
        pass
    return 128 * 1024 * 1024  # v5e/v6e default; v7x reports 64 MiB itself.


def _select_tiles(M, C_in, H_pad, C_out_pad, compute_dtype, out_dtype, budget):
    """Pick (tile_m, tile_h) that fit `budget` bytes of VMEM."""
    elt = jnp.dtype(compute_dtype).itemsize
    oelt = jnp.dtype(out_dtype).itemsize
    m_align = 16 if elt < 4 else 8  # bf16 packs 2 rows / sublane

    # tile_m: large (amortize per-step overhead / weight traffic) but capped so
    # the parallel M axis keeps >= 2 tiles for v7x's two TensorCores.
    if M <= 256:
        tile_m_pref = _round_up(M, m_align)
    else:
        tile_m_pref = min(1024, max(256, _round_up(_cdiv(M, 2), 256)))
        tile_m_pref = min(tile_m_pref, _round_up(M, 256))

    def usage(tm, th, tiled_h):
        w = 2 * (C_in * th + th * C_out_pad) * elt        # double-buffered weights
        b = 2 * (th + C_out_pad) * 4                      # f32 biases
        xb = 2 * tm * C_in * elt                          # double-buffered x tile
        ob = 2 * tm * C_out_pad * oelt                    # double-buffered out tile
        acc = tm * C_out_pad * 4 if tiled_h else 0        # f32 accumulator scratch
        inter = tm * th * 4                               # f32 GELU intermediate
        return w + b + xb + ob + acc + inter

    # hidden-tile candidates: full H (weight residency) first, then divisors of
    # H_pad that are multiples of 128 (never over-pad the hidden dim).
    n128 = H_pad // 128
    h_candidates = [H_pad]
    for k in range(2, n128 + 1):
        if n128 % k == 0:
            h_candidates.append(H_pad // k)

    m_candidates = []
    tm = tile_m_pref
    while True:
        m_candidates.append(tm)
        if tm <= m_align:
            break
        tm = max(m_align, _round_up(tm // 2, m_align))

    for tm in m_candidates:
        for th in h_candidates:
            if usage(tm, th, th != H_pad) <= budget:
                return tm, th
    return m_candidates[-1], min(128, H_pad)  # last-ditch fallback


# --------------------------------------------------------------------------
# kernels
# --------------------------------------------------------------------------
def _gelu_f32(h, approximate):
    if approximate:
        # tanh approximation: transcendental goes to the EUP slot.
        c = jnp.float32(0.7978845608028654)  # sqrt(2/pi)
        return 0.5 * h * (1.0 + jnp.tanh(c * (h + jnp.float32(0.044715) * h * h * h)))
    # Exact GELU (torch.nn.GELU default), f32 VPU polynomial erf.
    return 0.5 * h * (1.0 + jax.lax.erf(h * jnp.float32(0.7071067811865476)))


def mlp_kernel_fused(x_ref, w1_ref, b1_ref, w2_ref, b2_ref, o_ref, *, approximate):
    """Weight-resident path: full hidden dim per step, no accumulator."""
    h = jnp.dot(x_ref[...], w1_ref[...], preferred_element_type=jnp.float32)
    h = _gelu_f32(h + b1_ref[...], approximate)
    out = jnp.dot(h.astype(w2_ref.dtype), w2_ref[...],
                  preferred_element_type=jnp.float32)
    o_ref[...] = (out + b2_ref[...]).astype(o_ref.dtype)


def mlp_kernel_tiled_h(x_ref, w1_ref, b1_ref, w2_ref, b2_ref, o_ref, acc_ref, *,
                       approximate):
    """Fallback: hidden dim tiled, f32 VMEM accumulator across the H axis."""
    h_idx = pl.program_id(1)

    @pl.when(h_idx == 0)
    def _init():
        acc_ref[...] = jnp.zeros_like(acc_ref)

    h = jnp.dot(x_ref[...], w1_ref[...], preferred_element_type=jnp.float32)
    h = _gelu_f32(h + b1_ref[...], approximate)
    acc_ref[...] += jnp.dot(h.astype(w2_ref.dtype), w2_ref[...],
                            preferred_element_type=jnp.float32)

    @pl.when(h_idx == pl.num_programs(1) - 1)
    def _finalize():
        o_ref[...] = (acc_ref[...] + b2_ref[...]).astype(o_ref.dtype)


# --------------------------------------------------------------------------
# parameter preparation (hoisted out of the per-call path)
# --------------------------------------------------------------------------
def prepare_mlp_params(w1, b1, w2, b2, *, compute_dtype=jnp.bfloat16):
    """Pad H / C_out to multiples of 128 (zero padding is exact through GELU/fc2),
    cast matmul operands to `compute_dtype`, biases to f32.  Call once."""
    C_in, H = w1.shape
    C_out = w2.shape[1]
    H_pad = _round_up(H, 128)
    C_out_pad = _round_up(C_out, 128)

    w1p = jnp.pad(w1, ((0, 0), (0, H_pad - H))).astype(compute_dtype)
    b1p = jnp.pad(b1, (0, H_pad - H)).reshape(1, H_pad).astype(jnp.float32)
    w2p = jnp.pad(w2, ((0, H_pad - H), (0, C_out_pad - C_out))).astype(compute_dtype)
    b2p = jnp.pad(b2, (0, C_out_pad - C_out)).reshape(1, C_out_pad).astype(jnp.float32)

    meta = dict(C_in=C_in, H=H, C_out=C_out, H_pad=H_pad, C_out_pad=C_out_pad,
                compute_dtype=jnp.dtype(compute_dtype))
    return (w1p, b1p, w2p, b2p), meta


# --------------------------------------------------------------------------
# pallas_call wrappers
# --------------------------------------------------------------------------
@functools.partial(
    jax.jit,
    static_argnames=("C_out", "tile_m", "tile_h", "approximate_gelu",
                     "vmem_limit_bytes"))
def _mlp_pallas_apply(x, w1p, b1p, w2p, b2p, *, C_out, tile_m, tile_h,
                      approximate_gelu, vmem_limit_bytes):
    B, N, C_in = x.shape
    M = B * N
    H_pad = w1p.shape[1]
    C_out_pad = w2p.shape[1]
    compute_dtype = w1p.dtype
    out_dtype = x.dtype

    M_pad = _round_up(M, tile_m)
    x2 = x.reshape(M, C_in).astype(compute_dtype)
    if M_pad != M:
        x2 = jnp.pad(x2, ((0, M_pad - M), (0, 0)))

    n_m = M_pad // tile_m
    n_h = H_pad // tile_h

    if n_h == 1:
        # Weight-resident path: constant weight block indices -> the weight DMA
        # is issued once and reused for every M tile; single fused step.
        kernel = functools.partial(mlp_kernel_fused, approximate=approximate_gelu)
        out2 = pl.pallas_call(
            kernel,
            out_shape=jax.ShapeDtypeStruct((M_pad, C_out_pad), out_dtype),
            grid_spec=pltpu.PrefetchScalarGridSpec(
                num_scalar_prefetch=0,
                grid=(n_m,),
                in_specs=[
                    pl.BlockSpec((tile_m, C_in), lambda i: (i, 0)),      # x
                    pl.BlockSpec((C_in, H_pad), lambda i: (0, 0)),       # w1
                    pl.BlockSpec((1, H_pad), lambda i: (0, 0)),          # b1
                    pl.BlockSpec((H_pad, C_out_pad), lambda i: (0, 0)),  # w2
                    pl.BlockSpec((1, C_out_pad), lambda i: (0, 0)),      # b2
                ],
                out_specs=pl.BlockSpec((tile_m, C_out_pad), lambda i: (i, 0)),
            ),
            compiler_params=pltpu.CompilerParams(
                dimension_semantics=("parallel",),
                vmem_limit_bytes=vmem_limit_bytes,
            ),
        )(x2, w1p, b1p, w2p, b2p)
    else:
        # Fallback: hidden dim tiled, accumulate fc2 partials in f32 scratch.
        kernel = functools.partial(mlp_kernel_tiled_h, approximate=approximate_gelu)
        out2 = pl.pallas_call(
            kernel,
            out_shape=jax.ShapeDtypeStruct((M_pad, C_out_pad), out_dtype),
            grid_spec=pltpu.PrefetchScalarGridSpec(
                num_scalar_prefetch=0,
                grid=(n_m, n_h),
                in_specs=[
                    pl.BlockSpec((tile_m, C_in), lambda i, h: (i, 0)),      # x
                    pl.BlockSpec((C_in, tile_h), lambda i, h: (0, h)),      # w1
                    pl.BlockSpec((1, tile_h), lambda i, h: (0, h)),         # b1
                    pl.BlockSpec((tile_h, C_out_pad), lambda i, h: (h, 0)), # w2
                    pl.BlockSpec((1, C_out_pad), lambda i, h: (0, 0)),      # b2
                ],
                out_specs=pl.BlockSpec((tile_m, C_out_pad), lambda i, h: (i, 0)),
                scratch_shapes=[pltpu.VMEM((tile_m, C_out_pad), jnp.float32)],
            ),
            compiler_params=pltpu.CompilerParams(
                dimension_semantics=("parallel", "arbitrary"),
                vmem_limit_bytes=vmem_limit_bytes,
            ),
        )(x2, w1p, b1p, w2p, b2p)

    return out2[:M, :C_out].reshape(B, N, C_out)


def mlp_pallas(x, params, *, tile_m=None, tile_h=None, approximate_gelu=False):
    """x: (B, N, C_in); params: output of prepare_mlp_params()."""
    (w1p, b1p, w2p, b2p), meta = params
    B, N, C_in = x.shape
    assert C_in == meta["C_in"]
    M = B * N

    cap = _vmem_capacity_bytes()
    budget = int(cap * 0.70)                                   # tile budget
    vmem_limit = int(min(cap - 8 * 1024 * 1024, cap * 0.85))   # compiler limit

    auto_tm, auto_th = _select_tiles(M, C_in, meta["H_pad"], meta["C_out_pad"],
                                     meta["compute_dtype"], x.dtype, budget)
    tm = tile_m if tile_m is not None else auto_tm
    th = tile_h if tile_h is not None else auto_th

    m_align = 16 if jnp.dtype(meta["compute_dtype"]).itemsize < 4 else 8
    assert tm % m_align == 0, f"tile_m must be a multiple of {m_align}"
    assert meta["H_pad"] % th == 0 and (th % 128 == 0 or th == meta["H_pad"])

    return _mlp_pallas_apply(x, w1p, b1p, w2p, b2p,
                             C_out=meta["C_out"], tile_m=tm, tile_h=th,
                             approximate_gelu=approximate_gelu,
                             vmem_limit_bytes=vmem_limit)


# --------------------------------------------------------------------------
# pure-JAX reference (exact erf GELU, matches torch.nn.GELU default)
# --------------------------------------------------------------------------
def reference_mlp(x, w1, b1, w2, b2):
    h = jnp.einsum("bnc,ch->bnh", x, w1) + b1
    h = 0.5 * h * (1.0 + jax.lax.erf(h * 0.7071067811865476))
    return jnp.einsum("bnh,ho->bno", h, w2) + b2


if __name__ == "__main__":
    # Small shapes consistent with the module: batch=2, seq=8, in=32, hidden=64.
    B, N, C_in, HID = 2, 8, 32, 64
    C_out = C_in

    key = jax.random.PRNGKey(0)
    kx, k1, k2, k3, k4 = jax.random.split(key, 5)

    x = jax.random.normal(kx, (B, N, C_in), dtype=jnp.float32)
    # Parameters (stored pre-transposed vs. PyTorch's (out, in) convention).
    w1 = jax.random.normal(k1, (C_in, HID), dtype=jnp.float32) * 0.05
    b1 = jax.random.normal(k2, (HID,), dtype=jnp.float32) * 0.05
    w2 = jax.random.normal(k3, (HID, C_out), dtype=jnp.float32) * 0.05
    b2 = jax.random.normal(k4, (C_out,), dtype=jnp.float32) * 0.05

    ref = reference_mlp(x, w1, b1, w2, b2)

    # Performance path: bf16 MXU operands, f32 accumulation, weights prepared
    # (padded + cast) once and reused across calls.
    params_bf16 = prepare_mlp_params(w1, b1, w2, b2, compute_dtype=jnp.bfloat16)
    out_bf16 = mlp_pallas(x, params_bf16)
    jax.block_until_ready(out_bf16)
    assert out_bf16.shape == (B, N, C_out)
    assert jnp.allclose(out_bf16, ref, atol=2e-2, rtol=2e-2)

    # Full-precision path (exact-erf GELU): tight check vs the f32 reference.
    params_f32 = prepare_mlp_params(w1, b1, w2, b2, compute_dtype=jnp.float32)
    out_f32 = mlp_pallas(x, params_f32)
    jax.block_until_ready(out_f32)
    assert jnp.allclose(out_f32, ref, atol=1e-4, rtol=1e-4)

    # Optional tanh-approximate GELU (cheaper VALU path on v6e/v7x), gated.
    out_tanh = mlp_pallas(x, params_f32, approximate_gelu=True)
    jax.block_until_ready(out_tanh)
    assert jnp.allclose(out_tanh, ref, atol=1e-2, rtol=1e-2)

    # Exercise the tiled-hidden (accumulator) fallback path with a larger H.
    HID2 = 256
    k5, k6 = jax.random.split(k4, 2)
    w1b = jax.random.normal(k5, (C_in, HID2), dtype=jnp.float32) * 0.05
    b1b = jax.random.normal(k6, (HID2,), dtype=jnp.float32) * 0.05
    w2b = jax.random.normal(k5, (HID2, C_out), dtype=jnp.float32) * 0.05
    ref2 = reference_mlp(x, w1b, b1b, w2b, b2)
    params2 = prepare_mlp_params(w1b, b1b, w2b, b2, compute_dtype=jnp.float32)
    out_tiled = mlp_pallas(x, params2, tile_h=128)   # forces H_pad // 128 = 2 tiles
    jax.block_until_ready(out_tiled)
    assert jnp.allclose(out_tiled, ref2, atol=1e-3, rtol=1e-3)

    print("KERNEL_OK")
</pallas_src>

<mosaic_0001>
module attributes {stable_mosaic.version = 11 : i64} {
  func.func @mlp_kernel_fused(%arg0: i32, %arg1: memref<16x32xbf16, #tpu.memory_space<vmem>>, %arg2: memref<32x128xbf16, #tpu.memory_space<vmem>>, %arg3: memref<1x128xf32, #tpu.memory_space<vmem>>, %arg4: memref<128x128xbf16, #tpu.memory_space<vmem>>, %arg5: memref<1x128xf32, #tpu.memory_space<vmem>>, %arg6: memref<16x128xf32, #tpu.memory_space<vmem>>) attributes {dimension_semantics = [#tpu.dimension_semantics<parallel>], iteration_bounds = array<i64: 1>, scalar_prefetch = 0 : i64, scratch_operands = 0 : i64, tpu.core_type = #tpu.core_type<tc>, window_params = [{transform_indices = @transform_0, window_bounds = array<i64: 16, 32>}, {pipeline_mode = #tpu.pipeline_mode<synchronous>, transform_indices = @transform_1, window_bounds = array<i64: 32, 128>}, {pipeline_mode = #tpu.pipeline_mode<synchronous>, transform_indices = @transform_2, window_bounds = array<i64: 1, 128>}, {pipeline_mode = #tpu.pipeline_mode<synchronous>, transform_indices = @transform_3, window_bounds = array<i64: 128, 128>}, {pipeline_mode = #tpu.pipeline_mode<synchronous>, transform_indices = @transform_4, window_bounds = array<i64: 1, 128>}, {transform_indices = @transform_5, window_bounds = array<i64: 16, 128>}]} {
    %c0 = arith.constant 0 : index
    %c0_0 = arith.constant 0 : index
    %0 = vector.load %arg1[%c0, %c0_0] : memref<16x32xbf16, #tpu.memory_space<vmem>>, vector<16x32xbf16>
    %c0_1 = arith.constant 0 : index
    %c0_2 = arith.constant 0 : index
    %1 = vector.load %arg2[%c0_1, %c0_2] : memref<32x128xbf16, #tpu.memory_space<vmem>>, vector<32x128xbf16>
    %cst = arith.constant dense<0.000000e+00> : vector<16x128xf32>
    %2 = tpu.matmul %0, %1, %cst {dimension_numbers = #tpu.dot_dimension_numbers<[1], [0], [0], [1], [0, 0, 1, 1], [], []>} : vector<16x32xbf16>, vector<32x128xbf16>, vector<16x128xf32> -> vector<16x128xf32>
    %c0_3 = arith.constant 0 : index
    %c0_4 = arith.constant 0 : index
    %3 = vector.load %arg3[%c0_3, %c0_4] : memref<1x128xf32, #tpu.memory_space<vmem>>, vector<1x128xf32>
    %4 = vector.broadcast %3 : vector<1x128xf32> to vector<16x128xf32>
    %5 = arith.addf %2, %4 : vector<16x128xf32>
    %cst_5 = arith.constant 5.000000e-01 : f32
    %6 = vector.broadcast %cst_5 : f32 to vector<16x128xf32>
    %7 = arith.mulf %6, %5 : vector<16x128xf32>
    %cst_6 = arith.constant 0.707106769 : f32
    %8 = vector.broadcast %cst_6 : f32 to vector<16x128xf32>
    %9 = arith.mulf %5, %8 : vector<16x128xf32>
    %10 = math.erf %9 : vector<16x128xf32>
    %cst_7 = arith.constant 1.000000e+00 : f32
    %11 = vector.broadcast %cst_7 : f32 to vector<16x128xf32>
    %12 = arith.addf %11, %10 : vector<16x128xf32>
    %13 = arith.mulf %7, %12 : vector<16x128xf32>
    %14 = arith.truncf %13 : vector<16x128xf32> to vector<16x128xbf16>
    %c0_8 = arith.constant 0 : index
    %c0_9 = arith.constant 0 : index
    %15 = vector.load %arg4[%c0_8, %c0_9] : memref<128x128xbf16, #tpu.memory_space<vmem>>, vector<128x128xbf16>
    %cst_10 = arith.constant dense<0.000000e+00> : vector<16x128xf32>
    %16 = tpu.matmul %14, %15, %cst_10 {dimension_numbers = #tpu.dot_dimension_numbers<[1], [0], [0], [1], [0, 0, 1, 1], [], []>} : vector<16x128xbf16>, vector<128x128xbf16>, vector<16x128xf32> -> vector<16x128xf32>
    %c0_11 = arith.constant 0 : index
    %c0_12 = arith.constant 0 : index
    %17 = vector.load %arg5[%c0_11, %c0_12] : memref<1x128xf32, #tpu.memory_space<vmem>>, vector<1x128xf32>
    %18 = vector.broadcast %17 : vector<1x128xf32> to vector<16x128xf32>
    %19 = arith.addf %16, %18 : vector<16x128xf32>
    %c0_13 = arith.constant 0 : index
    %c0_14 = arith.constant 0 : index
    %20 = vector.load %arg6[%c0_13, %c0_14] : memref<16x128xf32, #tpu.memory_space<vmem>>, vector<16x128xf32>
    tpu.vector_store %arg6[%c0_13, %c0_14], %19 {strides = array<i32>} : memref<16x128xf32, #tpu.memory_space<vmem>>, vector<16x128xf32>,
    return
  }
  func.func @transform_0(%arg0: i32) -> (i32, i32) {
    %c0_i32 = arith.constant 0 : i32
    %c0_i32_0 = arith.constant 0 : i32
    return %arg0, %c0_i32 : i32, i32
  }
  func.func @transform_1(%arg0: i32) -> (i32, i32) {
    %c0_i32 = arith.constant 0 : i32
    %c0_i32_0 = arith.constant 0 : i32
    %c0_i32_1 = arith.constant 0 : i32
    return %c0_i32, %c0_i32_0 : i32, i32
  }
  func.func @transform_2(%arg0: i32) -> (i32, i32) {
    %c0_i32 = arith.constant 0 : i32
    %c0_i32_0 = arith.constant 0 : i32
    %c0_i32_1 = arith.constant 0 : i32
    return %c0_i32, %c0_i32_0 : i32, i32
  }
  func.func @transform_3(%arg0: i32) -> (i32, i32) {
    %c0_i32 = arith.constant 0 : i32
    %c0_i32_0 = arith.constant 0 : i32
    %c0_i32_1 = arith.constant 0 : i32
    return %c0_i32, %c0_i32_0 : i32, i32
  }
  func.func @transform_4(%arg0: i32) -> (i32, i32) {
    %c0_i32 = arith.constant 0 : i32
    %c0_i32_0 = arith.constant 0 : i32
    %c0_i32_1 = arith.constant 0 : i32
    return %c0_i32, %c0_i32_0 : i32, i32
  }
  func.func @transform_5(%arg0: i32) -> (i32, i32) {
    %c0_i32 = arith.constant 0 : i32
    %c0_i32_0 = arith.constant 0 : i32
    return %arg0, %c0_i32 : i32, i32
  }
}

</mosaic_0001>

<llo_original>
// kernel: _mlp_pallas_apply.1
$region0: #{_mlp_pallas_apply.1}
  #allocation0 [shape = 'u32[]', space=smem, size = 0x4, offset = 0x4, fixed_abs, tag = 'smem constant byte address 0x4 - core index']
  #allocation1 [shape = 'u32[144,128]{1,0:T(1,128)}', space=vmem, size = 0x12000, scoped, tag = 'internal scratch']
  %s0 = inlined_call_operand.hbm [shape: bf16[16,32], index: 0, kind: input, shape index: {}]
  %s1 = inlined_call_operand.hbm [shape: bf16[32,128], index: 1, kind: input, shape index: {}]
  %s2 = inlined_call_operand.hbm [shape: f32[1,128], index: 2, kind: input, shape index: {}]
  %s3 = inlined_call_operand.hbm [shape: bf16[128,128], index: 3, kind: input, shape index: {}]
  %s4 = inlined_call_operand.hbm [shape: f32[1,128], index: 4, kind: input, shape index: {}]
  %s5 = inlined_call_operand.hbm [shape: f32[16,128], index: 5, kind: output, shape index: {}]
  %s6 = sld [smem:[#allocation0]]
  $region50: #{_mlp_pallas_apply.1} parent=0
    _
  %s8 = ssub.s32 1, %s6
  %s9 = scalar_select 0, %s8, %s6
  $region1: #{_mlp_pallas_apply.1} parent=0
    #allocation2 [shape = 'u8[4096]{0}', space=vmem, size = 0x1000, scoped, tag = 'input window, operand 0, single buffered']
    #allocation3 [shape = 's32[1]{0}', space=sflag, size = 0x4, scoped, tag = 'scoped memory for _mlp_pallas_apply.1']
    #allocation4 [shape = 's32[1]{0}', space=sflag, size = 0x4, scoped, tag = 'scoped memory for _mlp_pallas_apply.1']
    #allocation5 [shape = 'u8[8192]{0}', space=vmem, size = 0x2000, scoped, tag = 'input window, operand 1, single buffered']
    #allocation6 [shape = 's32[1]{0}', space=sflag, size = 0x4, scoped, tag = 'scoped memory for _mlp_pallas_apply.1']
    #allocation7 [shape = 'u8[512]{0}', space=vmem, size = 0x400, scoped, tag = 'input window, operand 2, single buffered']
    #allocation8 [shape = 'u8[32768]{0}', space=vmem, size = 0x8000, scoped, tag = 'input window, operand 3, single buffered']
    #allocation9 [shape = 's32[1]{0}', space=sflag, size = 0x4, scoped, tag = 'scoped memory for _mlp_pallas_apply.1']
    #allocation10 [shape = 'u8[512]{0}', space=vmem, size = 0x400, scoped, tag = 'input window, operand 4, single buffered']
    #allocation11 [shape = 'u8[8192]{0}', space=vmem, size = 0x2000, scoped, tag = 'output window, operand 0, single buffered']
    %10 = vsyncpa [#allocation3], 0
    %11 = vsyncpa [#allocation6], 0
    %12 = vsyncpa [#allocation9], 0
    %13 = vsyncpa [#allocation4], 0
    // Predicated region
    $region2: #{_mlp_pallas_apply.1} parent=1 // pred_check
      _
    $region3: #{_mlp_pallas_apply.1} parent=1 // pred_check_branch
      %15 = sbr.rel (0) target = $region5
    $region4: #{_mlp_pallas_apply.1} parent=1 // pred_region
      %s17 = ssub.s32 128, 128
      %18 = vsyncadd [#allocation3], %s17
      %s19 = sshll.u32 [#allocation2], 4
      %s20 = int_to_ptr.vmem [resolvable:$true] %s19
      %25 = dma.hbm_to_vmem [thread:$0]  %s0, 128, %s20, [#allocation3], 64, 64, 4
    $region5: #{_mlp_pallas_apply.1} parent=1 // pred_fallthru
      _
    // Predicated region
    $region6: #{_mlp_pallas_apply.1} parent=1 // pred_check
      _
    $region7: #{_mlp_pallas_apply.1} parent=1 // pred_check_branch
      %27 = sbr.rel (0) target = $region9
    $region8: #{_mlp_pallas_apply.1} parent=1 // pred_region
      %s29 = ssub.s32 256, 256
      %30 = vsyncadd [#allocation6], %s29
      %s31 = sshll.u32 [#allocation5], 4
      %s32 = int_to_ptr.vmem [resolvable:$true] %s31
      %37 = dma.hbm_to_vmem [thread:$0]  %s1, 256, %s32, [#allocation6], 64, 64, 4
    $region9: #{_mlp_pallas_apply.1} parent=1 // pred_fallthru
      _
    // Predicated region
    $region10: #{_mlp_pallas_apply.1} parent=1 // pred_check
      _
    $region11: #{_mlp_pallas_apply.1} parent=1 // pred_check_branch
      %39 = sbr.rel (0) target = $region13
    $region12: #{_mlp_pallas_apply.1} parent=1 // pred_region
      %s41 = ssub.s32 16, 16
      %42 = vsyncadd [#allocation6], %s41
      %s44 = sshll.u32 [#allocation7], 4
      %s45 = int_to_ptr.vmem [resolvable:$true] %s44
      %47 = dma.hbm_to_vmem [thread:$0]  %s2, 16, %s45, [#allocation6]
    $region13: #{_mlp_pallas_apply.1} parent=1 // pred_fallthru
      _
    // Predicated region
    $region14: #{_mlp_pallas_apply.1} parent=1 // pred_check
      _
    $region15: #{_mlp_pallas_apply.1} parent=1 // pred_check_branch
      %49 = sbr.rel (0) target = $region17
    $region16: #{_mlp_pallas_apply.1} parent=1 // pred_region
      %s51 = ssub.s32 1024, 1024
      %52 = vsyncadd [#allocation9], %s51
      %s53 = sshll.u32 [#allocation8], 4
      %s54 = int_to_ptr.vmem [resolvable:$true] %s53
      %59 = dma.hbm_to_vmem [thread:$0]  %s3, 1024, %s54, [#allocation9], 64, 64, 4
    $region17: #{_mlp_pallas_apply.1} parent=1 // pred_fallthru
      _
    // Predicated region
    $region18: #{_mlp_pallas_apply.1} parent=1 // pred_check
      _
    $region19: #{_mlp_pallas_apply.1} parent=1 // pred_check_branch
      %61 = sbr.rel (0) target = $region21
    $region20: #{_mlp_pallas_apply.1} parent=1 // pred_region
      %s63 = ssub.s32 16, 16
      %64 = vsyncadd [#allocation9], %s63
      %s66 = sshll.u32 [#allocation10], 4
      %s67 = int_to_ptr.vmem [resolvable:$true] %s66
      %69 = dma.hbm_to_vmem [thread:$0]  %s4, 16, %s67, [#allocation9]
    $region21: #{_mlp_pallas_apply.1} parent=1 // pred_fallthru
      _
    // Predicated region
    $region22: #{_mlp_pallas_apply.1} parent=1 // pred_check
      _
    $region23: #{_mlp_pallas_apply.1} parent=1 // pred_check_branch
      %71 = sbr.rel (0) target = $region25
    $region24: #{_mlp_pallas_apply.1} parent=1 // pred_region
      %72 = dma.done [#allocation3], 128
    $region25: #{_mlp_pallas_apply.1} parent=1 // pred_fallthru
      _
    // Predicated region
    $region26: #{_mlp_pallas_apply.1} parent=1 // pred_check
      _
    $region27: #{_mlp_pallas_apply.1} parent=1 // pred_check_branch
      %74 = sbr.rel (0) target = $region29
    $region28: #{_mlp_pallas_apply.1} parent=1 // pred_region
      %75 = dma.done [#allocation6], 256
    $region29: #{_mlp_pallas_apply.1} parent=1 // pred_fallthru
      _
    // Predicated region
    $region30: #{_mlp_pallas_apply.1} parent=1 // pred_check
      _
    $region31: #{_mlp_pallas_apply.1} parent=1 // pred_check_branch
      %77 = sbr.rel (0) target = $region33
    $region32: #{_mlp_pallas_apply.1} parent=1 // pred_region
      %78 = dma.done [#allocation6], 16
    $region33: #{_mlp_pallas_apply.1} parent=1 // pred_fallthru
      _
    // Predicated region
    $region34: #{_mlp_pallas_apply.1} parent=1 // pred_check
      _
    $region35: #{_mlp_pallas_apply.1} parent=1 // pred_check_branch
      %80 = sbr.rel (0) target = $region37
    $region36: #{_mlp_pallas_apply.1} parent=1 // pred_region
      %81 = dma.done [#allocation9], 1024
    $region37: #{_mlp_pallas_apply.1} parent=1 // pred_fallthru
      _
    // Predicated region
    $region38: #{_mlp_pallas_apply.1} parent=1 // pred_check
      _
    $region39: #{_mlp_pallas_apply.1} parent=1 // pred_check_branch
      %83 = sbr.rel (0) target = $region41
    $region40: #{_mlp_pallas_apply.1} parent=1 // pred_region
      %84 = dma.done [#allocation9], 16
    $region41: #{_mlp_pallas_apply.1} parent=1 // pred_fallthru
      _
    %v86 = vld [vmem:[#allocation2] sm:$0xf]
    %v87 = vld [vmem:[#allocation2 + $0x4] sm:$0xf]
    %v88 = vld [vmem:[#allocation5] sm:$0xf]
    %v89 = vld [vmem:[#allocation5 + $0x4] sm:$0xf]
    %v90 = vld [vmem:[#allocation5 + $0x8] sm:$0xf]
    %v91 = vld [vmem:[#allocation5 + $0xc] sm:$0xf]
    %v92 = vld [vmem:[#allocation7] sm:$0x1]
    %v94 = vlaneseq
    %v95 = vshrl.u32 %v94, 7
    %v96 = vsub.s32 0, %v95
    %v97 = vrot.slane %v92, %v96
    %v101 = vunpack.c.l.b16 %v86
    %v102 = vunpack.c.l.b16 %v87
    %v103 = vpack.c.b16 %v102, %v101
    %v108 = vunpack.c.l.b16 %v88
    %v109 = vunpack.c.l.b16 %v89
    %v110 = vunpack.c.l.b16 %v90
    %v111 = vunpack.c.l.b16 %v91
    %v112 = vpack.c.b16 %v109, %v108
    %v113 = vpack.c.b16 %v111, %v110
    %vm116 = vcmask 261120
    %v118 = vsel %vm116, %v103, 0
    %120 = vmatprep.subr.bf16.mxu0 0
    %121 = vmatpush1.bf16.msra.mxu0 %v112
    %122 = vmatprep.subr.bf16.mxu0 0
    %123 = vmatpush1.bf16.msra.mxu0 %v113
    %124 = vmatprep.subr.bf16.mxu0 0
    %125 = vmatpush1.bf16.msra.mxu0 0
    %126 = vmatprep.subr.bf16.mxu0 0
    %127 = vmatpush1.bf16.msra.mxu0 0
    %128 = vmatprep.subr.bf16.mxu0 0
    %129 = vmatpush1.bf16.msra.mxu0 0
    %130 = vmatprep.subr.bf16.mxu0 0
    %131 = vmatpush1.bf16.msra.mxu0 0
    %132 = vmatprep.subr.bf16.mxu0 0
    %133 = vmatpush1.bf16.msra.mxu0 0
    %134 = vmatprep.subr.bf16.mxu0 0
    %135 = vmatpush1.bf16.msra.mxu0 0
    %136 = vmatprep.subr.bf16.mxu0 0
    %137 = vmatpush1.bf16.msra.mxu0 0
    %138 = vmatprep.subr.bf16.mxu0 0
    %139 = vmatpush1.bf16.msra.mxu0 0
    %140 = vmatprep.subr.bf16.mxu0 0
    %141 = vmatpush1.bf16.msra.mxu0 0
    %142 = vmatprep.subr.bf16.mxu0 0
    %143 = vmatpush1.bf16.msra.mxu0 0
    %144 = vmatprep.subr.bf16.mxu0 0
    %145 = vmatpush1.bf16.msra.mxu0 0
    %146 = vmatprep.subr.bf16.mxu0 0
    %147 = vmatpush1.bf16.msra.mxu0 0
    %148 = vmatprep.subr.bf16.mxu0 0
    %149 = vmatpush1.bf16.msra.mxu0 0
    %150 = vmatprep.subr.bf16.mxu0 0
    %151 = vmatpush1.bf16.msra.mxu0 0
    %152 = vmatprep.mubr.bf16.mxu0 0
    %153 = vmatmul.mubr.bf16.gmra.mrb[0].mxu0 %v118
    %v154 = vpop.f32.mrb[0].mxu0
    %v155 = vadd.f32 %v97, %v154
    %v156 = vpop.f32.mrb[0].mxu0
    %v157 = vpop.f32.mrb[0].mxu0
    %v158 = vadd.f32 %v97, %v157
    %v159 = vpop.f32.mrb[0].mxu0
    %160 = vdwg.mxu0
    %v161 = vmul.f32 %v155, 0.5
    %v162 = vmul.f32 %v158, 0.5
    %v163 = vmul.f32 %v155, 0.70710677
    %v164 = vmul.f32 %v158, 0.70710677
    %v165 = verf.f32.pop %v163
    %v166 = verf.f32.pop %v164
    %v167 = vadd.f32 %v165, 1.0
    %v168 = vadd.f32 %v166, 1.0
    %v169 = vmul.f32 %v161, %v167
    %v170 = vmul.f32 %v162, %v168
    %v171 = vpack.c.bf16 %v170, %v169
    %v172 = vld [vmem:[#allocation8] sm:$0xf]
    %v173 = vld [vmem:[#allocation8 + $0x4] sm:$0xf]
    %v174 = vld [vmem:[#allocation8 + $0x8] sm:$0xf]
    %v175 = vld [vmem:[#allocation8 + $0xc] sm:$0xf]
    %v176 = vld [vmem:[#allocation8 + $0x10] sm:$0xf]
    %v177 = vld [vmem:[#allocation8 + $0x14] sm:$0xf]
    %v178 = vld [vmem:[#allocation8 + $0x18] sm:$0xf]
    %v179 = vld [vmem:[#allocation8 + $0x1c] sm:$0xf]
    %v180 = vld [vmem:[#allocation8 + $0x20] sm:$0xf]
    %v181 = vld [vmem:[#allocation8 + $0x24] sm:$0xf]
    %v182 = vld [vmem:[#allocation8 + $0x28] sm:$0xf]
    %v183 = vld [vmem:[#allocation8 + $0x2c] sm:$0xf]
    %v184 = vld [vmem:[#allocation8 + $0x30] sm:$0xf]
    %v185 = vld [vmem:[#allocation8 + $0x34] sm:$0xf]
    %v186 = vld [vmem:[#allocation8 + $0x38] sm:$0xf]
    %v187 = vld [vmem:[#allocation8 + $0x3c] sm:$0xf]
    %v188 = vld [vmem:[#allocation10] sm:$0x1]
    %v190 = vlaneseq
    %v191 = vshrl.u32 %v190, 7
    %v192 = vsub.s32 0, %v191
    %v193 = vrot.slane %v188, %v192
    %v211 = vunpack.c.l.b16 %v172
    %v212 = vunpack.c.l.b16 %v173
    %v213 = vunpack.c.l.b16 %v174
    %v214 = vunpack.c.l.b16 %v175
    %v215 = vunpack.c.l.b16 %v176
    %v216 = vunpack.c.l.b16 %v177
    %v217 = vunpack.c.l.b16 %v178
    %v218 = vunpack.c.l.b16 %v179
    %v219 = vunpack.c.l.b16 %v180
    %v220 = vunpack.c.l.b16 %v181
    %v221 = vunpack.c.l.b16 %v182
    %v222 = vunpack.c.l.b16 %v183
    %v223 = vunpack.c.l.b16 %v184
    %v224 = vunpack.c.l.b16 %v185
    %v225 = vunpack.c.l.b16 %v186
    %v226 = vunpack.c.l.b16 %v187
    %v227 = vpack.c.b16 %v212, %v211
    %v228 = vpack.c.b16 %v214, %v213
    %v229 = vpack.c.b16 %v216, %v215
    %v230 = vpack.c.b16 %v218, %v217
    %v231 = vpack.c.b16 %v220, %v219
    %v232 = vpack.c.b16 %v222, %v221
    %v233 = vpack.c.b16 %v224, %v223
    %v234 = vpack.c.b16 %v226, %v225
    %243 = vmatprep.subr.bf16.mxu0 0
    %244 = vmatpush1.bf16.msra.mxu0 %v227
    %245 = vmatprep.subr.bf16.mxu0 0
    %246 = vmatpush1.bf16.msra.mxu0 %v228
    %247 = vmatprep.subr.bf16.mxu0 0
    %248 = vmatpush1.bf16.msra.mxu0 %v229
    %249 = vmatprep.subr.bf16.mxu0 0
    %250 = vmatpush1.bf16.msra.mxu0 %v230
    %251 = vmatprep.subr.bf16.mxu0 0
    %252 = vmatpush1.bf16.msra.mxu0 %v231
    %253 = vmatprep.subr.bf16.mxu0 0
    %254 = vmatpush1.bf16.msra.mxu0 %v232
    %255 = vmatprep.subr.bf16.mxu0 0
    %256 = vmatpush1.bf16.msra.mxu0 %v233
    %257 = vmatprep.subr.bf16.mxu0 0
    %258 = vmatpush1.bf16.msra.mxu0 %v234
    %259 = vmatprep.subr.bf16.mxu0 0
    %260 = vmatpush1.bf16.msra.mxu0 0
    %261 = vmatprep.subr.bf16.mxu0 0
    %262 = vmatpush1.bf16.msra.mxu0 0
    %263 = vmatprep.subr.bf16.mxu0 0
    %264 = vmatpush1.bf16.msra.mxu0 0
    %265 = vmatprep.subr.bf16.mxu0 0
    %266 = vmatpush1.bf16.msra.mxu0 0
    %267 = vmatprep.subr.bf16.mxu0 0
    %268 = vmatpush1.bf16.msra.mxu0 0
    %269 = vmatprep.subr.bf16.mxu0 0
    %270 = vmatpush1.bf16.msra.mxu0 0
    %271 = vmatprep.subr.bf16.mxu0 0
    %272 = vmatpush1.bf16.msra.mxu0 0
    %273 = vmatprep.subr.bf16.mxu0 0
    %274 = vmatpush1.bf16.msra.mxu0 0
    %275 = vmatprep.mubr.bf16.mxu0 0
    %276 = vmatmul.mubr.bf16.gmra.mrb[0].mxu0 %v171
    %v277 = vpop.f32.mrb[0].mxu0
    %v278 = vadd.f32 %v193, %v277
    %v279 = vpop.f32.mrb[0].mxu0
    %v280 = vpop.f32.mrb[0].mxu0
    %v281 = vadd.f32 %v193, %v280
    %v282 = vpop.f32.mrb[0].mxu0
    %283 = vdwg.mxu0
    %284 = vst [vmem:[#allocation11] sm:$0xff] %v278
    %285 = vst [vmem:[#allocation11 + $0x8] sm:$0xff] %v281
    // Predicated region
    $region42: #{_mlp_pallas_apply.1} parent=1 // pred_check
      _
    $region43: #{_mlp_pallas_apply.1} parent=1 // pred_check_branch
      %287 = sbr.rel (0) target = $region45
    $region44: #{_mlp_pallas_apply.1} parent=1 // pred_region
      %s289 = ssub.s32 256, 256
      %290 = vsyncadd [#allocation4], %s289
      %s291 = sshll.u32 [#allocation11], 4
      %s292 = int_to_ptr.vmem [resolvable:$true] %s291
      %297 = dma.vmem_to_hbm [thread:$0]  %s292, 256, %s5, [#allocation4], 128, 128, 8
    $region45: #{_mlp_pallas_apply.1} parent=1 // pred_fallthru
      _
    // Predicated region
    $region46: #{_mlp_pallas_apply.1} parent=1 // pred_check
      _
    $region47: #{_mlp_pallas_apply.1} parent=1 // pred_check_branch
      %299 = sbr.rel (0) target = $region49
    $region48: #{_mlp_pallas_apply.1} parent=1 // pred_region
      %300 = dma.done [#allocation4], 256
    $region49: #{_mlp_pallas_apply.1} parent=1 // pred_fallthru
      _
    %301 = vsyncpa [#allocation3], 1
    %302 = vsyncpa [#allocation6], 1
    %303 = vsyncpa [#allocation9], 1
    %304 = vsyncpa [#allocation4], 1

</llo_original>
